<compile_context>
chip_gen: v7x
topology: tpu7x:2x2x1
jax: 0.10.0
libtpu: 0.0.40
codegen_flags: <defaults>
</compile_context>

<pallas_src>
import jax
import jax.numpy as jnp
from jax.experimental import pallas as pl
from jax.experimental.pallas import tpu as pltpu


def _pool_fc_kernel(x_ref, w_ref, b_ref, o_ref):
    """Fused global-average-pool + Linear for one batch tile.

    x_ref: [tb, C, HW]   feature-map tile (spatial flattened onto the lane axis)
    w_ref: [C, Op]  f32  fc weight, pre-scaled by 1/(H*W), zero-padded 64 -> Op
    b_ref: [1, Op]  f32  fc bias (zero-padded)
    o_ref: [tb, Op] f32  padded output tile (lane-dense store)
    """
    # Upcast before reducing so the spatial accumulation is exact f32 even for
    # bf16 feature maps (and all elementwise math stays f32 -> v5e friendly).
    x = x_ref[...].astype(jnp.float32)
    pooled = jnp.sum(x, axis=-1)                       # [tb, C]  XLU spatial sum
    # fc (with the folded 1/(H*W) scale) on the MXU; f32 accumulation.
    out = jnp.dot(pooled, w_ref[...],
                  preferred_element_type=jnp.float32)  # [tb, Op]
    o_ref[...] = out + b_ref[...]                      # broadcast bias


def _pick_batch_tile(B, C, HW, itemsize, vmem_budget_bytes=6 << 20):
    """Largest batch tile whose double-buffered x tile stays under the budget.

    Budget is conservative for v7x (64 MiB physical / 32 MiB default-scoped VMEM);
    bigger tiles would not help this HBM-bandwidth-bound head anyway.
    """
    per_item = 2 * C * HW * itemsize            # x tile is double-buffered
    cap = max(1, vmem_budget_bytes // per_item)
    if B <= cap:
        return B                                # whole batch in one full-extent tile
    # Multiple of 8 so a partial (tb, 128) output block satisfies the (8,128) rule.
    return min(B, max(8, (cap // 8) * 8))


def custom_model_head(feats_nchw, fc_weight, fc_bias):
    """Fused adaptive_avg_pool2d((1,1)) + fc, matching CustomModel's forward tail.

    feats_nchw: [B, C, H, W]  encoder's last feature map (NCHW, f32 or bf16)
    fc_weight : [O, C]        PyTorch Linear weight layout (O = 64)
    fc_bias   : [O]
    returns   : [B, O] float32
    """
    B, C, H, W = feats_nchw.shape
    O = fc_weight.shape[0]
    HW = H * W
    Op = ((O + 127) // 128) * 128               # pad fc output dim -> lane-dense

    # Free reshape of the NCHW layout: no HBM relayout of the big feature map.
    x = feats_nchw.reshape(B, C, HW)

    # Tiny one-time parameter prep: transpose to [C, Op], fold in the 1/(H*W)
    # pooling scale, zero-pad O -> Op. Kept f32 so in-kernel accumulation is f32.
    w = jnp.zeros((C, Op), jnp.float32).at[:, :O].set(
        fc_weight.astype(jnp.float32).T / float(HW))
    b = jnp.zeros((1, Op), jnp.float32).at[:, :O].set(
        fc_bias.astype(jnp.float32)[None, :])

    tb = _pick_batch_tile(B, C, HW, x.dtype.itemsize)
    grid = (pl.cdiv(B, tb),)

    out_padded = pl.pallas_call(
        _pool_fc_kernel,
        out_shape=jax.ShapeDtypeStruct((B, Op), jnp.float32),
        grid=grid,
        in_specs=[
            pl.BlockSpec((tb, C, HW), lambda i: (i, 0, 0)),   # pipelined x tiles
            pl.BlockSpec((C, Op), lambda i: (0, 0)),          # resident weight
            pl.BlockSpec((1, Op), lambda i: (0, 0)),          # resident bias
        ],
        out_specs=pl.BlockSpec((tb, Op), lambda i: (i, 0)),
        compiler_params=pltpu.CompilerParams(
            dimension_semantics=("parallel",),   # v7x: shard batch across 2 TCs
            vmem_limit_bytes=32 * 1024 * 1024,
        ),
    )(x, w, b)

    return out_padded[:, :O]                     # drop the 64->128 padding (tiny)


if __name__ == "__main__":
    # Encoder's last feature map for a small backbone: B=2, C_enc=128, 8x8 spatial.
    B, C, H, W = 2, 128, 8, 8
    O = 64

    key = jax.random.PRNGKey(0)
    k_x, k_w, k_b = jax.random.split(key, 3)

    feats = jax.random.normal(k_x, (B, C, H, W), dtype=jnp.float32)
    # Deterministic "Linear(C, 64)" parameters (PyTorch layout: weight [64, C]).
    fc_w = jax.random.normal(k_w, (O, C), dtype=jnp.float32) * 0.02
    fc_b = jax.random.normal(k_b, (O,), dtype=jnp.float32) * 0.01

    # float32 feature-map path.
    out = jax.block_until_ready(custom_model_head(feats, fc_w, fc_b))
    pooled_ref = jnp.mean(feats, axis=(2, 3))                        # [B, C]
    ref = jnp.dot(pooled_ref, fc_w.T,
                  precision=jax.lax.Precision.HIGHEST) + fc_b        # [B, O]
    assert out.shape == (B, O)
    assert jnp.allclose(out, ref, atol=1e-3, rtol=1e-3), (
        "f32 mismatch, max abs err = %g" % float(jnp.max(jnp.abs(out - ref))))

    # bf16 feature-map path (recommended when the encoder emits bf16: half the HBM
    # traffic for the big tensor; accumulation stays f32 inside the kernel).
    feats_bf16 = feats.astype(jnp.bfloat16)
    out_bf16 = jax.block_until_ready(custom_model_head(feats_bf16, fc_w, fc_b))
    pooled_bf = jnp.mean(feats_bf16.astype(jnp.float32), axis=(2, 3))
    ref_bf = jnp.dot(pooled_bf, fc_w.T,
                     precision=jax.lax.Precision.HIGHEST) + fc_b
    assert jnp.allclose(out_bf16, ref_bf, atol=1e-2, rtol=1e-2), (
        "bf16 mismatch, max abs err = %g" % float(jnp.max(jnp.abs(out_bf16 - ref_bf))))

    print("KERNEL_OK")
</pallas_src>

<mosaic_0001>
module attributes {stable_mosaic.version = 11 : i64} {
  func.func @_pool_fc_kernel(%arg0: i32, %arg1: memref<2x128x64xf32, #tpu.memory_space<vmem>>, %arg2: memref<128x128xf32, #tpu.memory_space<vmem>>, %arg3: memref<1x128xf32, #tpu.memory_space<vmem>>, %arg4: memref<2x128xf32, #tpu.memory_space<vmem>>) attributes {dimension_semantics = [#tpu.dimension_semantics<parallel>], iteration_bounds = array<i64: 1>, scalar_prefetch = 0 : i64, scratch_operands = 0 : i64, tpu.core_type = #tpu.core_type<tc>, window_params = [{transform_indices = @transform_0, window_bounds = array<i64: 2, 128, 64>}, {pipeline_mode = #tpu.pipeline_mode<synchronous>, transform_indices = @transform_1, window_bounds = array<i64: 128, 128>}, {pipeline_mode = #tpu.pipeline_mode<synchronous>, transform_indices = @transform_2, window_bounds = array<i64: 1, 128>}, {transform_indices = @transform_3, window_bounds = array<i64: 2, 128>}]} {
    %c0 = arith.constant 0 : index
    %c0_0 = arith.constant 0 : index
    %c0_1 = arith.constant 0 : index
    %0 = vector.load %arg1[%c0, %c0_0, %c0_1] : memref<2x128x64xf32, #tpu.memory_space<vmem>>, vector<2x128x64xf32>
    %cst = arith.constant dense<0.000000e+00> : vector<2x128xf32>
    %1 = vector.multi_reduction <add>, %0, %cst [2] : vector<2x128x64xf32> to vector<2x128xf32>
    %c0_2 = arith.constant 0 : index
    %c0_3 = arith.constant 0 : index
    %2 = vector.load %arg2[%c0_2, %c0_3] : memref<128x128xf32, #tpu.memory_space<vmem>>, vector<128x128xf32>
    %cst_4 = arith.constant dense<0.000000e+00> : vector<2x128xf32>
    %3 = tpu.matmul %1, %2, %cst_4 {dimension_numbers = #tpu.dot_dimension_numbers<[1], [0], [0], [1], [0, 0, 1, 1], [], []>} : vector<2x128xf32>, vector<128x128xf32>, vector<2x128xf32> -> vector<2x128xf32>
    %c0_5 = arith.constant 0 : index
    %c0_6 = arith.constant 0 : index
    %4 = vector.load %arg3[%c0_5, %c0_6] : memref<1x128xf32, #tpu.memory_space<vmem>>, vector<1x128xf32>
    %5 = vector.broadcast %4 : vector<1x128xf32> to vector<2x128xf32>
    %6 = arith.addf %3, %5 : vector<2x128xf32>
    %c0_7 = arith.constant 0 : index
    %c0_8 = arith.constant 0 : index
    %7 = vector.load %arg4[%c0_7, %c0_8] : memref<2x128xf32, #tpu.memory_space<vmem>>, vector<2x128xf32>
    tpu.vector_store %arg4[%c0_7, %c0_8], %6 {strides = array<i32>} : memref<2x128xf32, #tpu.memory_space<vmem>>, vector<2x128xf32>,
    return
  }
  func.func @transform_0(%arg0: i32) -> (i32, i32, i32) {
    %c0_i32 = arith.constant 0 : i32
    %c0_i32_0 = arith.constant 0 : i32
    %c0_i32_1 = arith.constant 0 : i32
    return %arg0, %c0_i32, %c0_i32_0 : i32, i32, i32
  }
  func.func @transform_1(%arg0: i32) -> (i32, i32) {
    %c0_i32 = arith.constant 0 : i32
    %c0_i32_0 = arith.constant 0 : i32
    %c0_i32_1 = arith.constant 0 : i32
    return %c0_i32, %c0_i32_0 : i32, i32
  }
  func.func @transform_2(%arg0: i32) -> (i32, i32) {
    %c0_i32 = arith.constant 0 : i32
    %c0_i32_0 = arith.constant 0 : i32
    %c0_i32_1 = arith.constant 0 : i32
    return %c0_i32, %c0_i32_0 : i32, i32
  }
  func.func @transform_3(%arg0: i32) -> (i32, i32) {
    %c0_i32 = arith.constant 0 : i32
    %c0_i32_0 = arith.constant 0 : i32
    return %arg0, %c0_i32 : i32, i32
  }
}

</mosaic_0001>

<llo_original>
// kernel: tpu_custom_call.1
$region0: #{tpu_custom_call.1}
  #allocation0 [shape = 'u32[]', space=smem, size = 0x4, offset = 0x4, fixed_abs, tag = 'smem constant byte address 0x4 - core index']
  #allocation1 [shape = 'u32[144,128]{1,0:T(1,128)}', space=vmem, size = 0x12000, scoped, tag = 'internal scratch']
  %s0 = inlined_call_operand.vmem [shape: f32[2,128,64], index: 0, kind: input, shape index: {}]
  %s1 = inlined_call_operand.vmem [shape: f32[128,128], index: 1, kind: input, shape index: {}]
  %s2 = inlined_call_operand.vmem [shape: f32[1,128], index: 2, kind: input, shape index: {}]
  %s3 = inlined_call_operand.hbm [shape: f32[2,128], index: 3, kind: output, shape index: {}]
  %s4 = sld [smem:[#allocation0]]
  $region22: #{tpu_custom_call.1} parent=0
    _
  %s6 = ssub.s32 1, %s4
  %s7 = scalar_select 0, %s6, %s4
  $region1: #{tpu_custom_call.1} parent=0
    #allocation2 [shape = 'u8[1024]{0}', space=vmem, size = 0x400, scoped, tag = 'output window, operand 0, single buffered']
    #allocation3 [shape = 's32[1]{0}', space=sflag, size = 0x4, scoped, tag = 'scoped memory for tpu_custom_call.1']
    %8 = vsyncpa [#allocation3], 0
    // Predicated region
    $region2: #{tpu_custom_call.1} parent=1 // pred_check
      _
    $region3: #{tpu_custom_call.1} parent=1 // pred_check_branch
      %10 = sbr.rel (0) target = $region5
    $region4: #{tpu_custom_call.1} parent=1 // pred_region
      _
    $region5: #{tpu_custom_call.1} parent=1 // pred_fallthru
      _
    // Predicated region
    $region6: #{tpu_custom_call.1} parent=1 // pred_check
      _
    $region7: #{tpu_custom_call.1} parent=1 // pred_check_branch
      %12 = sbr.rel (0) target = $region9
    $region8: #{tpu_custom_call.1} parent=1 // pred_region
      _
    $region9: #{tpu_custom_call.1} parent=1 // pred_fallthru
      _
    // Predicated region
    $region10: #{tpu_custom_call.1} parent=1 // pred_check
      _
    $region11: #{tpu_custom_call.1} parent=1 // pred_check_branch
      %14 = sbr.rel (0) target = $region13
    $region12: #{tpu_custom_call.1} parent=1 // pred_region
      _
    $region13: #{tpu_custom_call.1} parent=1 // pred_fallthru
      _
    %v15 = vld [vmem:[%s0] sm:$0xff]
    %v16 = vld [vmem:[%s0 + $0x8] sm:$0xff]
    %v17 = vld [vmem:[%s0 + $0x10] sm:$0xff]
    %v18 = vld [vmem:[%s0 + $0x18] sm:$0xff]
    %v19 = vld [vmem:[%s0 + $0x20] sm:$0xff]
    %v20 = vld [vmem:[%s0 + $0x28] sm:$0xff]
    %v21 = vld [vmem:[%s0 + $0x30] sm:$0xff]
    %v22 = vld [vmem:[%s0 + $0x38] sm:$0xff]
    %v23 = vld [vmem:[%s0 + $0x40] sm:$0xff]
    %v24 = vld [vmem:[%s0 + $0x48] sm:$0xff]
    %v25 = vld [vmem:[%s0 + $0x50] sm:$0xff]
    %v26 = vld [vmem:[%s0 + $0x58] sm:$0xff]
    %v27 = vld [vmem:[%s0 + $0x60] sm:$0xff]
    %v28 = vld [vmem:[%s0 + $0x68] sm:$0xff]
    %v29 = vld [vmem:[%s0 + $0x70] sm:$0xff]
    %v30 = vld [vmem:[%s0 + $0x78] sm:$0xff]
    %v31 = vld [vmem:[%s0 + $0x80] sm:$0xff]
    %v32 = vld [vmem:[%s0 + $0x88] sm:$0xff]
    %v33 = vld [vmem:[%s0 + $0x90] sm:$0xff]
    %v34 = vld [vmem:[%s0 + $0x98] sm:$0xff]
    %v35 = vld [vmem:[%s0 + $0xa0] sm:$0xff]
    %v36 = vld [vmem:[%s0 + $0xa8] sm:$0xff]
    %v37 = vld [vmem:[%s0 + $0xb0] sm:$0xff]
    %v38 = vld [vmem:[%s0 + $0xb8] sm:$0xff]
    %v39 = vld [vmem:[%s0 + $0xc0] sm:$0xff]
    %v40 = vld [vmem:[%s0 + $0xc8] sm:$0xff]
    %v41 = vld [vmem:[%s0 + $0xd0] sm:$0xff]
    %v42 = vld [vmem:[%s0 + $0xd8] sm:$0xff]
    %v43 = vld [vmem:[%s0 + $0xe0] sm:$0xff]
    %v44 = vld [vmem:[%s0 + $0xe8] sm:$0xff]
    %v45 = vld [vmem:[%s0 + $0xf0] sm:$0xff]
    %v46 = vld [vmem:[%s0 + $0xf8] sm:$0xff]
    %vm47 = vcmask 523264
    %v48 = vsel %vm47, %v15, 0.0
    %49 = vadd.xlane.f32.xlu0 %v48
    %v50 = vpop.xlane.xlu0 %49
    %v51 = vsel %vm47, %v16, 0.0
    %52 = vadd.xlane.f32.xlu0 %v51
    %v53 = vpop.xlane.xlu0 %52
    %v54 = vsel %vm47, %v17, 0.0
    %55 = vadd.xlane.f32.xlu0 %v54
    %v56 = vpop.xlane.xlu0 %55
    %v57 = vsel %vm47, %v18, 0.0
    %58 = vadd.xlane.f32.xlu0 %v57
    %v59 = vpop.xlane.xlu0 %58
    %v60 = vsel %vm47, %v19, 0.0
    %61 = vadd.xlane.f32.xlu0 %v60
    %v62 = vpop.xlane.xlu0 %61
    %v63 = vsel %vm47, %v20, 0.0
    %64 = vadd.xlane.f32.xlu0 %v63
    %v65 = vpop.xlane.xlu0 %64
    %v66 = vsel %vm47, %v21, 0.0
    %67 = vadd.xlane.f32.xlu0 %v66
    %v68 = vpop.xlane.xlu0 %67
    %v69 = vsel %vm47, %v22, 0.0
    %70 = vadd.xlane.f32.xlu0 %v69
    %v71 = vpop.xlane.xlu0 %70
    %v72 = vsel %vm47, %v23, 0.0
    %73 = vadd.xlane.f32.xlu0 %v72
    %v74 = vpop.xlane.xlu0 %73
    %v75 = vsel %vm47, %v24, 0.0
    %76 = vadd.xlane.f32.xlu0 %v75
    %v77 = vpop.xlane.xlu0 %76
    %v78 = vsel %vm47, %v25, 0.0
    %79 = vadd.xlane.f32.xlu0 %v78
    %v80 = vpop.xlane.xlu0 %79
    %v81 = vsel %vm47, %v26, 0.0
    %82 = vadd.xlane.f32.xlu0 %v81
    %v83 = vpop.xlane.xlu0 %82
    %v84 = vsel %vm47, %v27, 0.0
    %85 = vadd.xlane.f32.xlu0 %v84
    %v86 = vpop.xlane.xlu0 %85
    %v87 = vsel %vm47, %v28, 0.0
    %88 = vadd.xlane.f32.xlu0 %v87
    %v89 = vpop.xlane.xlu0 %88
    %v90 = vsel %vm47, %v29, 0.0
    %91 = vadd.xlane.f32.xlu0 %v90
    %v92 = vpop.xlane.xlu0 %91
    %v93 = vsel %vm47, %v30, 0.0
    %94 = vadd.xlane.f32.xlu0 %v93
    %v95 = vpop.xlane.xlu0 %94
    %v96 = vsel %vm47, %v31, 0.0
    %97 = vadd.xlane.f32.xlu0 %v96
    %v98 = vpop.xlane.xlu0 %97
    %v99 = vsel %vm47, %v32, 0.0
    %100 = vadd.xlane.f32.xlu0 %v99
    %v101 = vpop.xlane.xlu0 %100
    %v102 = vsel %vm47, %v33, 0.0
    %103 = vadd.xlane.f32.xlu0 %v102
    %v104 = vpop.xlane.xlu0 %103
    %v105 = vsel %vm47, %v34, 0.0
    %106 = vadd.xlane.f32.xlu0 %v105
    %v107 = vpop.xlane.xlu0 %106
    %v108 = vsel %vm47, %v35, 0.0
    %109 = vadd.xlane.f32.xlu0 %v108
    %v110 = vpop.xlane.xlu0 %109
    %v111 = vsel %vm47, %v36, 0.0
    %112 = vadd.xlane.f32.xlu0 %v111
    %v113 = vpop.xlane.xlu0 %112
    %v114 = vsel %vm47, %v37, 0.0
    %115 = vadd.xlane.f32.xlu0 %v114
    %v116 = vpop.xlane.xlu0 %115
    %v117 = vsel %vm47, %v38, 0.0
    %118 = vadd.xlane.f32.xlu0 %v117
    %v119 = vpop.xlane.xlu0 %118
    %v120 = vsel %vm47, %v39, 0.0
    %121 = vadd.xlane.f32.xlu0 %v120
    %v122 = vpop.xlane.xlu0 %121
    %v123 = vsel %vm47, %v40, 0.0
    %124 = vadd.xlane.f32.xlu0 %v123
    %v125 = vpop.xlane.xlu0 %124
    %v126 = vsel %vm47, %v41, 0.0
    %127 = vadd.xlane.f32.xlu0 %v126
    %v128 = vpop.xlane.xlu0 %127
    %v129 = vsel %vm47, %v42, 0.0
    %130 = vadd.xlane.f32.xlu0 %v129
    %v131 = vpop.xlane.xlu0 %130
    %v132 = vsel %vm47, %v43, 0.0
    %133 = vadd.xlane.f32.xlu0 %v132
    %v134 = vpop.xlane.xlu0 %133
    %v135 = vsel %vm47, %v44, 0.0
    %136 = vadd.xlane.f32.xlu0 %v135
    %v137 = vpop.xlane.xlu0 %136
    %v138 = vsel %vm47, %v45, 0.0
    %139 = vadd.xlane.f32.xlu0 %v138
    %v140 = vpop.xlane.xlu0 %139
    %v141 = vsel %vm47, %v46, 0.0
    %142 = vadd.xlane.f32.xlu0 %v141
    %v143 = vpop.xlane.xlu0 %142
    %v144 = vld [vmem:[%s1] sm:$0xff]
    %v145 = vld [vmem:[%s1 + $0x8] sm:$0xff]
    %v146 = vld [vmem:[%s1 + $0x10] sm:$0xff]
    %v147 = vld [vmem:[%s1 + $0x18] sm:$0xff]
    %v148 = vld [vmem:[%s1 + $0x20] sm:$0xff]
    %v149 = vld [vmem:[%s1 + $0x28] sm:$0xff]
    %v150 = vld [vmem:[%s1 + $0x30] sm:$0xff]
    %v151 = vld [vmem:[%s1 + $0x38] sm:$0xff]
    %v152 = vld [vmem:[%s1 + $0x40] sm:$0xff]
    %v153 = vld [vmem:[%s1 + $0x48] sm:$0xff]
    %v154 = vld [vmem:[%s1 + $0x50] sm:$0xff]
    %v155 = vld [vmem:[%s1 + $0x58] sm:$0xff]
    %v156 = vld [vmem:[%s1 + $0x60] sm:$0xff]
    %v157 = vld [vmem:[%s1 + $0x68] sm:$0xff]
    %v158 = vld [vmem:[%s1 + $0x70] sm:$0xff]
    %v159 = vld [vmem:[%s1 + $0x78] sm:$0xff]
    %v160 = vld [vmem:[%s2] sm:$0x1]
    %v162 = vlaneseq
    %v163 = vshrl.u32 %v162, 7
    %v164 = vsub.s32 0, %v163
    %v165 = vrot.slane %v160, %v164
    %v199 = vlaneseq
    %v200 = vand.u32 %v199, 127
    %v201 = vlaneseq
    %v202 = vshrl.u32 %v201, 7
    %v203 = vsub.s32 %v200, %v202
    %v204 = vrot.slane %v50, %v203
    %v205 = vadd.s32 %v200, 4294967288
    %v206 = vlaneseq
    %v207 = vshrl.u32 %v206, 7
    %v208 = vsub.s32 %v205, %v207
    %v209 = vrot.slane %v53, %v208
    %vm210 = vcmask 130112
    %v211 = vsel %vm210, %v209, %v204
    %v212 = vadd.s32 %v200, 4294967280
    %v213 = vlaneseq
    %v214 = vshrl.u32 %v213, 7
    %v215 = vsub.s32 %v212, %v214
    %v216 = vrot.slane %v56, %v215
    %vm217 = vcmask 195712
    %v218 = vsel %vm217, %v216, %v211
    %v219 = vadd.s32 %v200, 4294967272
    %v220 = vlaneseq
    %v221 = vshrl.u32 %v220, 7
    %v222 = vsub.s32 %v219, %v221
    %v223 = vrot.slane %v59, %v222
    %vm224 = vcmask 261312
    %v225 = vsel %vm224, %v223, %v218
    %v226 = vadd.s32 %v200, 4294967264
    %v227 = vlaneseq
    %v228 = vshrl.u32 %v227, 7
    %v229 = vsub.s32 %v226, %v228
    %v230 = vrot.slane %v62, %v229
    %vm231 = vcmask 326912
    %v232 = vsel %vm231, %v230, %v225
    %v233 = vadd.s32 %v200, 4294967256
    %v234 = vlaneseq
    %v235 = vshrl.u32 %v234, 7
    %v236 = vsub.s32 %v233, %v235
    %v237 = vrot.slane %v65, %v236
    %vm238 = vcmask 392512
    %v239 = vsel %vm238, %v237, %v232
    %v240 = vadd.s32 %v200, 4294967248
    %v241 = vlaneseq
    %v242 = vshrl.u32 %v241, 7
    %v243 = vsub.s32 %v240, %v242
    %v244 = vrot.slane %v68, %v243
    %vm245 = vcmask 458112
    %v246 = vsel %vm245, %v244, %v239
    %v247 = vadd.s32 %v200, 4294967240
    %v248 = vlaneseq
    %v249 = vshrl.u32 %v248, 7
    %v250 = vsub.s32 %v247, %v249
    %v251 = vrot.slane %v71, %v250
    %vm252 = vcmask 523712
    %v253 = vsel %vm252, %v251, %v246
    %v254 = vadd.s32 %v200, 4294967232
    %v255 = vlaneseq
    %v256 = vshrl.u32 %v255, 7
    %v257 = vsub.s32 %v254, %v256
    %v258 = vrot.slane %v74, %v257
    %vm259 = vcmask 589312
    %v260 = vsel %vm259, %v258, %v253
    %v261 = vadd.s32 %v200, 4294967224
    %v262 = vlaneseq
    %v263 = vshrl.u32 %v262, 7
    %v264 = vsub.s32 %v261, %v263
    %v265 = vrot.slane %v77, %v264
    %vm266 = vcmask 654912
    %v267 = vsel %vm266, %v265, %v260
    %v268 = vadd.s32 %v200, 4294967216
    %v269 = vlaneseq
    %v270 = vshrl.u32 %v269, 7
    %v271 = vsub.s32 %v268, %v270
    %v272 = vrot.slane %v80, %v271
    %vm273 = vcmask 720512
    %v274 = vsel %vm273, %v272, %v267
    %v275 = vadd.s32 %v200, 4294967208
    %v276 = vlaneseq
    %v277 = vshrl.u32 %v276, 7
    %v278 = vsub.s32 %v275, %v277
    %v279 = vrot.slane %v83, %v278
    %vm280 = vcmask 786112
    %v281 = vsel %vm280, %v279, %v274
    %v282 = vadd.s32 %v200, 4294967200
    %v283 = vlaneseq
    %v284 = vshrl.u32 %v283, 7
    %v285 = vsub.s32 %v282, %v284
    %v286 = vrot.slane %v86, %v285
    %vm287 = vcmask 851712
    %v288 = vsel %vm287, %v286, %v281
    %v289 = vadd.s32 %v200, 4294967192
    %v290 = vlaneseq
    %v291 = vshrl.u32 %v290, 7
    %v292 = vsub.s32 %v289, %v291
    %v293 = vrot.slane %v89, %v292
    %vm294 = vcmask 917312
    %v295 = vsel %vm294, %v293, %v288
    %v296 = vadd.s32 %v200, 4294967184
    %v297 = vlaneseq
    %v298 = vshrl.u32 %v297, 7
    %v299 = vsub.s32 %v296, %v298
    %v300 = vrot.slane %v92, %v299
    %vm301 = vcmask 982912
    %v302 = vsel %vm301, %v300, %v295
    %v303 = vadd.s32 %v200, 4294967176
    %v304 = vlaneseq
    %v305 = vshrl.u32 %v304, 7
    %v306 = vsub.s32 %v303, %v305
    %v307 = vrot.slane %v95, %v306
    %vm308 = vcmask 1048512
    %v309 = vsel %vm308, %v307, %v302
    %v310 = vlaneseq
    %v311 = vshrl.u32 %v310, 7
    %v312 = vsub.s32 %v200, %v311
    %v313 = vrot.slane %v98, %v312
    %v314 = vlaneseq
    %v315 = vshrl.u32 %v314, 7
    %v316 = vsub.s32 %v205, %v315
    %v317 = vrot.slane %v101, %v316
    %v318 = vsel %vm210, %v317, %v313
    %v319 = vlaneseq
    %v320 = vshrl.u32 %v319, 7
    %v321 = vsub.s32 %v212, %v320
    %v322 = vrot.slane %v104, %v321
    %v323 = vsel %vm217, %v322, %v318
    %v324 = vlaneseq
    %v325 = vshrl.u32 %v324, 7
    %v326 = vsub.s32 %v219, %v325
    %v327 = vrot.slane %v107, %v326
    %v328 = vsel %vm224, %v327, %v323
    %v329 = vlaneseq
    %v330 = vshrl.u32 %v329, 7
    %v331 = vsub.s32 %v226, %v330
    %v332 = vrot.slane %v110, %v331
    %v333 = vsel %vm231, %v332, %v328
    %v334 = vlaneseq
    %v335 = vshrl.u32 %v334, 7
    %v336 = vsub.s32 %v233, %v335
    %v337 = vrot.slane %v113, %v336
    %v338 = vsel %vm238, %v337, %v333
    %v339 = vlaneseq
    %v340 = vshrl.u32 %v339, 7
    %v341 = vsub.s32 %v240, %v340
    %v342 = vrot.slane %v116, %v341
    %v343 = vsel %vm245, %v342, %v338
    %v344 = vlaneseq
    %v345 = vshrl.u32 %v344, 7
    %v346 = vsub.s32 %v247, %v345
    %v347 = vrot.slane %v119, %v346
    %v348 = vsel %vm252, %v347, %v343
    %v349 = vlaneseq
    %v350 = vshrl.u32 %v349, 7
    %v351 = vsub.s32 %v254, %v350
    %v352 = vrot.slane %v122, %v351
    %v353 = vsel %vm259, %v352, %v348
    %v354 = vlaneseq
    %v355 = vshrl.u32 %v354, 7
    %v356 = vsub.s32 %v261, %v355
    %v357 = vrot.slane %v125, %v356
    %v358 = vsel %vm266, %v357, %v353
    %v359 = vlaneseq
    %v360 = vshrl.u32 %v359, 7
    %v361 = vsub.s32 %v268, %v360
    %v362 = vrot.slane %v128, %v361
    %v363 = vsel %vm273, %v362, %v358
    %v364 = vlaneseq
    %v365 = vshrl.u32 %v364, 7
    %v366 = vsub.s32 %v275, %v365
    %v367 = vrot.slane %v131, %v366
    %v368 = vsel %vm280, %v367, %v363
    %v369 = vlaneseq
    %v370 = vshrl.u32 %v369, 7
    %v371 = vsub.s32 %v282, %v370
    %v372 = vrot.slane %v134, %v371
    %v373 = vsel %vm287, %v372, %v368
    %v374 = vlaneseq
    %v375 = vshrl.u32 %v374, 7
    %v376 = vsub.s32 %v289, %v375
    %v377 = vrot.slane %v137, %v376
    %v378 = vsel %vm294, %v377, %v373
    %v379 = vlaneseq
    %v380 = vshrl.u32 %v379, 7
    %v381 = vsub.s32 %v296, %v380
    %v382 = vrot.slane %v140, %v381
    %v383 = vsel %vm301, %v382, %v378
    %v384 = vlaneseq
    %v385 = vshrl.u32 %v384, 7
    %v386 = vsub.s32 %v303, %v385
    %v387 = vrot.slane %v143, %v386
    %v388 = vsel %vm308, %v387, %v383
    %vm389 = vcmask 1041409
    %v390 = vsel %vm389, %v388, %v309
    %392 = vmatprep.subr.mxu0 0.0
    %393 = vmatpush1.msra.mxu0 %v144
    %394 = vmatprep.subr.mxu0 0.0
    %395 = vmatpush1.msra.mxu0 %v145
    %396 = vmatprep.subr.mxu0 0.0
    %397 = vmatpush1.msra.mxu0 %v146
    %398 = vmatprep.subr.mxu0 0.0
    %399 = vmatpush1.msra.mxu0 %v147
    %400 = vmatprep.subr.mxu0 0.0
    %401 = vmatpush1.msra.mxu0 %v148
    %402 = vmatprep.subr.mxu0 0.0
    %403 = vmatpush1.msra.mxu0 %v149
    %404 = vmatprep.subr.mxu0 0.0
    %405 = vmatpush1.msra.mxu0 %v150
    %406 = vmatprep.subr.mxu0 0.0
    %407 = vmatpush1.msra.mxu0 %v151
    %408 = vmatprep.subr.mxu0 0.0
    %409 = vmatpush1.msra.mxu0 %v152
    %410 = vmatprep.subr.mxu0 0.0
    %411 = vmatpush1.msra.mxu0 %v153
    %412 = vmatprep.subr.mxu0 0.0
    %413 = vmatpush1.msra.mxu0 %v154
    %414 = vmatprep.subr.mxu0 0.0
    %415 = vmatpush1.msra.mxu0 %v155
    %416 = vmatprep.subr.mxu0 0.0
    %417 = vmatpush1.msra.mxu0 %v156
    %418 = vmatprep.subr.mxu0 0.0
    %419 = vmatpush1.msra.mxu0 %v157
    %420 = vmatprep.subr.mxu0 0.0
    %421 = vmatpush1.msra.mxu0 %v158
    %422 = vmatprep.subr.mxu0 0.0
    %423 = vmatpush1.msra.mxu0 %v159
    %424 = vmatprep.subr.mxu0 0.0
    %425 = vmatpush1.msra.mxu0 0.0
    %426 = vmatprep.subr.mxu0 0.0
    %427 = vmatpush1.msra.mxu0 0.0
    %428 = vmatprep.subr.mxu0 0.0
    %429 = vmatpush1.msra.mxu0 0.0
    %430 = vmatprep.subr.mxu0 0.0
    %431 = vmatpush1.msra.mxu0 0.0
    %432 = vmatprep.subr.mxu0 0.0
    %433 = vmatpush1.msra.mxu0 0.0
    %434 = vmatprep.subr.mxu0 0.0
    %435 = vmatpush1.msra.mxu0 0.0
    %436 = vmatprep.subr.mxu0 0.0
    %437 = vmatpush1.msra.mxu0 0.0
    %438 = vmatprep.subr.mxu0 0.0
    %439 = vmatpush1.msra.mxu0 0.0
    %440 = vmatprep.subr.mxu0 0.0
    %441 = vmatpush1.msra.mxu0 0.0
    %442 = vmatprep.subr.mxu0 0.0
    %443 = vmatpush1.msra.mxu0 0.0
    %444 = vmatprep.subr.mxu0 0.0
    %445 = vmatpush1.msra.mxu0 0.0
    %446 = vmatprep.subr.mxu0 0.0
    %447 = vmatpush1.msra.mxu0 0.0
    %448 = vmatprep.subr.mxu0 0.0
    %449 = vmatpush1.msra.mxu0 0.0
    %450 = vmatprep.subr.mxu0 0.0
    %451 = vmatpush1.msra.mxu0 0.0
    %452 = vmatprep.subr.mxu0 0.0
    %453 = vmatpush1.msra.mxu0 0.0
    %454 = vmatprep.subr.mxu0 0.0
    %455 = vmatpush1.msra.mxu0 0.0
    %456 = vmatprep.mubr.f32.mxu0 0.0
    %457 = vmatmul.mubr.f32.gmra.mrb[0].mxu0 %v390
    %v458 = vpop.f32.mrb[0].mxu0
    %v459 = vadd.f32 %v165, %v458
    %v460 = vpop.f32.mrb[0].mxu0
    %461 = vdwg.mxu0
    %462 = vst [vmem:[#allocation2] sm:$0x3] %v459
    // Predicated region
    $region14: #{tpu_custom_call.1} parent=1 // pred_check
      _
    $region15: #{tpu_custom_call.1} parent=1 // pred_check_branch
      %464 = sbr.rel (0) target = $region17
    $region16: #{tpu_custom_call.1} parent=1 // pred_region
      %s466 = ssub.s32 32, 32
      %467 = vsyncadd [#allocation3], %s466
      %s469 = sshll.u32 [#allocation2], 4
      %s470 = int_to_ptr.vmem [resolvable:$true] %s469
      %472 = dma.vmem_to_hbm [thread:$0]  %s470, 32, %s3, [#allocation3]
    $region17: #{tpu_custom_call.1} parent=1 // pred_fallthru
      _
    // Predicated region
    $region18: #{tpu_custom_call.1} parent=1 // pred_check
      _
    $region19: #{tpu_custom_call.1} parent=1 // pred_check_branch
      %474 = sbr.rel (0) target = $region21
    $region20: #{tpu_custom_call.1} parent=1 // pred_region
      %475 = dma.done [#allocation3], 32
    $region21: #{tpu_custom_call.1} parent=1 // pred_fallthru
      _
    %476 = vsyncpa [#allocation3], 1

</llo_original>
